<compile_context>
chip_gen: v5e
topology: v5e:2x2
jax: 0.10.0
libtpu: 0.0.40
codegen_flags: <defaults>
</compile_context>

<pallas_src>
import jax
import jax.numpy as jnp
import numpy as np
from jax.experimental import pallas as pl
from jax.experimental.pallas import tpu as pltpu

EPSILON = 1e-5
MOMENTUM = 0.9

# Fused (single-pass) path budget: native x + f32 temporary + y must fit VMEM
# with headroom on every generation.
_FUSED_VMEM_BUDGET = 12 << 20
_TILE_TARGET_BYTES = 2 << 20


def _pick_spatial_tile(S, C, itemsize=4, target_bytes=_TILE_TARGET_BYTES):
    """Largest lane-dense (multiple-of-128) divisor of S whose (C, TS) tile fits target."""
    if C * S * itemsize <= target_bytes:
        return S
    max_ts = max(128, (target_bytes // max(1, C * itemsize)) // 128 * 128)
    ts = min(max_ts, (S // 128) * 128)
    while ts >= 128:
        if S % ts == 0:
            return ts
        ts -= 128
    # TODO(synk): S has no 128-aligned divisor under the budget; fall back to full rows.
    return S


# ----------------------------------------------------------------------------
# Kernels
# ----------------------------------------------------------------------------
def _bn_stats_kernel(x_ref, sum_ref, sumsq_ref):
    """Phase 1 of tiled two-pass: accumulate per-channel sum / sum-of-squares."""
    @pl.when(jnp.logical_and(pl.program_id(0) == 0, pl.program_id(1) == 0))
    def _init():
        sum_ref[...] = jnp.zeros_like(sum_ref)
        sumsq_ref[...] = jnp.zeros_like(sumsq_ref)

    x = x_ref[0].astype(jnp.float32)                       # (C, TS); f32 accumulation
    sum_ref[...] += jnp.sum(x, axis=1, keepdims=True)      # (C, 1)
    sumsq_ref[...] += jnp.sum(x * x, axis=1, keepdims=True)


def _bn_scale_bias_kernel(x_ref, scale_ref, bias_ref, y_ref):
    """y = x * scale + bias.  scale/bias fold gamma, beta, mean, rsqrt(var).

    No explicit whole-tile f32 upcast: per-expression promotion lets bf16 inputs
    stay cheap on v6e/v7x while the math is still done against f32 scale/bias.
    """
    y_ref[...] = (x_ref[...] * scale_ref[...] + bias_ref[...]).astype(y_ref.dtype)


def _bn_train_fused_kernel(x_ref, gamma_ref, beta_ref, mm_ref, mv_ref,
                           y_ref, new_mm_ref, new_mv_ref):
    """Fast path for small x: whole (N, C, S) slab resident; x read from HBM once."""
    xf = x_ref[...].astype(jnp.float32)                               # (N, C, S)
    cnt = jnp.float32(xf.shape[0] * xf.shape[2])
    mean = (jnp.sum(xf, axis=(0, 2), keepdims=True) / cnt)[0]         # (C, 1)
    msq = (jnp.sum(xf * xf, axis=(0, 2), keepdims=True) / cnt)[0]     # (C, 1)
    var = msq - mean * mean + EPSILON            # exactly the torch dim==4 branch
    scale = gamma_ref[...] * jax.lax.rsqrt(var)                       # (C, 1)
    bias = beta_ref[...] - mean * scale
    y_ref[...] = (xf * scale + bias).astype(y_ref.dtype)
    new_mm_ref[...] = mm_ref[...] * MOMENTUM + (1.0 - MOMENTUM) * mean
    new_mv_ref[...] = mv_ref[...] * MOMENTUM + (1.0 - MOMENTUM) * var


def _bn2d_train_kernel(x_ref, gamma_ref, beta_ref, mm_ref, mv_ref,
                       y_ref, new_mm_ref, new_mv_ref):
    """dim==2 training path.  Per the torch spec there is NO eps inside var here."""
    x = x_ref[...].astype(jnp.float32)                                # (N, C)
    n = jnp.float32(x.shape[0])
    mean = jnp.sum(x, axis=0, keepdims=True) / n                      # (1, C)
    var = jnp.sum(x * x, axis=0, keepdims=True) / n - mean * mean     # (1, C)
    scale = gamma_ref[...] * jax.lax.rsqrt(var)
    bias = beta_ref[...] - mean * scale
    y_ref[...] = (x * scale + bias).astype(y_ref.dtype)
    new_mm_ref[...] = mm_ref[...] * MOMENTUM + (1.0 - MOMENTUM) * mean
    new_mv_ref[...] = mv_ref[...] * MOMENTUM + (1.0 - MOMENTUM) * var


# ----------------------------------------------------------------------------
# pallas_call wrappers
# ----------------------------------------------------------------------------
def _bn_stats_tiled(x3):
    N, C, S = x3.shape
    TS = _pick_spatial_tile(S, C, 4)
    itemsize = x3.dtype.itemsize
    return pl.pallas_call(
        _bn_stats_kernel,
        out_shape=(jax.ShapeDtypeStruct((C, 1), jnp.float32),
                   jax.ShapeDtypeStruct((C, 1), jnp.float32)),
        grid=(N, S // TS),
        in_specs=[pl.BlockSpec((1, C, TS), lambda n, s: (n, 0, s))],
        out_specs=(pl.BlockSpec((C, 1), lambda n, s: (0, 0)),
                   pl.BlockSpec((C, 1), lambda n, s: (0, 0))),
        compiler_params=pltpu.CompilerParams(
            dimension_semantics=("arbitrary", "arbitrary")),
        cost_estimate=pl.CostEstimate(flops=3 * N * C * S, transcendentals=0,
                                      bytes_accessed=N * C * S * itemsize),
    )(x3)


def _bn_normalize_tiled(x3, scale, bias):
    N, C, S = x3.shape
    TS = _pick_spatial_tile(S, C, 4)
    itemsize = x3.dtype.itemsize
    return pl.pallas_call(
        _bn_scale_bias_kernel,
        out_shape=jax.ShapeDtypeStruct((N, C, S), x3.dtype),
        grid=(N, S // TS),
        in_specs=[pl.BlockSpec((1, C, TS), lambda n, s: (n, 0, s)),
                  pl.BlockSpec((C, 1), lambda n, s: (0, 0)),
                  pl.BlockSpec((C, 1), lambda n, s: (0, 0))],
        out_specs=pl.BlockSpec((1, C, TS), lambda n, s: (n, 0, s)),
        compiler_params=pltpu.CompilerParams(
            dimension_semantics=("parallel", "parallel")),
        cost_estimate=pl.CostEstimate(flops=2 * N * C * S, transcendentals=0,
                                      bytes_accessed=2 * N * C * S * itemsize),
    )(x3, scale, bias)


def _bn_train_fused(x3, gamma, beta, mm, mv):
    N, C, S = x3.shape
    vmem = pl.BlockSpec(memory_space=pltpu.MemorySpace.VMEM)
    return pl.pallas_call(
        _bn_train_fused_kernel,
        out_shape=(jax.ShapeDtypeStruct((N, C, S), x3.dtype),
                   jax.ShapeDtypeStruct((C, 1), jnp.float32),
                   jax.ShapeDtypeStruct((C, 1), jnp.float32)),
        in_specs=[vmem] * 5,
        out_specs=(vmem, vmem, vmem),
        cost_estimate=pl.CostEstimate(flops=6 * N * C * S, transcendentals=C,
                                      bytes_accessed=2 * N * C * S * x3.dtype.itemsize),
    )(x3, gamma, beta, mm, mv)


def _normalize_single_block(x, scale, bias):
    vmem = pl.BlockSpec(memory_space=pltpu.MemorySpace.VMEM)
    return pl.pallas_call(
        _bn_scale_bias_kernel,
        out_shape=jax.ShapeDtypeStruct(x.shape, x.dtype),
        in_specs=[vmem, vmem, vmem],
        out_specs=vmem,
    )(x, scale, bias)


# ----------------------------------------------------------------------------
# Functional front-ends
# ----------------------------------------------------------------------------
def batch_norm_nchw_pallas(x, gamma, beta, moving_mean, moving_var, *,
                           training=True, force_tiled=False):
    """x: (N, C, H, W); gamma/beta/moving_*: (C,). Returns (y, new_mm, new_mv)."""
    N, C, H, W = x.shape
    S = H * W
    x3 = x.reshape(N, C, S)  # free: NCHW-native view, no transpose
    g = gamma.reshape(C, 1).astype(jnp.float32)
    b = beta.reshape(C, 1).astype(jnp.float32)
    mm = moving_mean.reshape(C, 1).astype(jnp.float32)
    mv = moving_var.reshape(C, 1).astype(jnp.float32)

    if training:
        fits_fused = (3 * x3.size * 4) <= _FUSED_VMEM_BUDGET
        if fits_fused and not force_tiled:
            y3, new_mm, new_mv = _bn_train_fused(x3, g, b, mm, mv)
        else:
            s1, s2 = _bn_stats_tiled(x3)
            cnt = jnp.float32(N * S)
            mean = s1 / cnt
            var = s2 / cnt - mean * mean + EPSILON       # torch dim==4 branch
            scale = g * jax.lax.rsqrt(var)               # tiny (C,1) glue math
            bias = b - mean * scale
            y3 = _bn_normalize_tiled(x3, scale, bias)
            new_mm = mm * MOMENTUM + (1.0 - MOMENTUM) * mean
            new_mv = mv * MOMENTUM + (1.0 - MOMENTUM) * var
    else:
        scale = g * jax.lax.rsqrt(mv + EPSILON)
        bias = b - mm * scale
        y3 = _bn_normalize_tiled(x3, scale, bias)
        new_mm, new_mv = mm, mv

    return y3.reshape(N, C, H, W), new_mm.reshape(-1), new_mv.reshape(-1)


def batch_norm_2d_pallas(x, gamma, beta, moving_mean, moving_var, *, training=True):
    """x: (N, C). Returns (y, new_mm, new_mv).  Single-block kernels.

    TODO(synk): tile over N (like the NCHW path) if (N, C) ever outgrows VMEM.
    """
    N, C = x.shape
    g = gamma.reshape(1, C).astype(jnp.float32)
    b = beta.reshape(1, C).astype(jnp.float32)
    mm = moving_mean.reshape(1, C).astype(jnp.float32)
    mv = moving_var.reshape(1, C).astype(jnp.float32)
    vmem = pl.BlockSpec(memory_space=pltpu.MemorySpace.VMEM)
    if training:
        y, new_mm, new_mv = pl.pallas_call(
            _bn2d_train_kernel,
            out_shape=(jax.ShapeDtypeStruct((N, C), x.dtype),
                       jax.ShapeDtypeStruct((1, C), jnp.float32),
                       jax.ShapeDtypeStruct((1, C), jnp.float32)),
            in_specs=[vmem] * 5,
            out_specs=(vmem, vmem, vmem),
        )(x, g, b, mm, mv)
        return y, new_mm.reshape(-1), new_mv.reshape(-1)
    scale = g * jax.lax.rsqrt(mv + EPSILON)
    bias = b - mm * scale
    y = _normalize_single_block(x, scale, bias)
    return y, moving_mean, moving_var


class BatchNormPallas:
    """Mirror of the PyTorch BatchNorm module (dim==4 NCHW and dim==2)."""

    def __init__(self, num_features, dim):
        assert dim in (2, 4)
        self.dim = dim
        self.num_features = num_features
        # Deterministic init, exactly as the PyTorch __init__ (stored flat).
        self.gamma = jnp.ones((num_features,), jnp.float32)
        self.beta = jnp.zeros((num_features,), jnp.float32)
        self.moving_mean = jnp.zeros((num_features,), jnp.float32)
        self.moving_var = jnp.ones((num_features,), jnp.float32)
        self.force_tiled = False  # test hook: force the two-pass tiled path

    def __call__(self, x, training=True):
        if self.dim == 4:
            y, new_mm, new_mv = batch_norm_nchw_pallas(
                x, self.gamma, self.beta, self.moving_mean, self.moving_var,
                training=training, force_tiled=self.force_tiled)
        else:
            y, new_mm, new_mv = batch_norm_2d_pallas(
                x, self.gamma, self.beta, self.moving_mean, self.moving_var,
                training=training)
        self.moving_mean, self.moving_var = new_mm, new_mv
        return y


# ----------------------------------------------------------------------------
# Pure-JAX references of the torch semantics (for checking)
# ----------------------------------------------------------------------------
def _ref_nchw_train(x, mm, mv):
    mean = jnp.mean(x, axis=(0, 2, 3), keepdims=True)
    var = jnp.mean(x * x, axis=(0, 2, 3), keepdims=True) - mean ** 2 + EPSILON
    y = (x - mean) / jnp.sqrt(var)                 # gamma=1, beta=0
    new_mm = mm.reshape(1, -1, 1, 1) * MOMENTUM + (1 - MOMENTUM) * mean
    new_mv = mv.reshape(1, -1, 1, 1) * MOMENTUM + (1 - MOMENTUM) * var
    return y, new_mm.reshape(-1), new_mv.reshape(-1)


def _ref_2d_train(x):
    mean = jnp.mean(x, axis=0, keepdims=True)
    var = jnp.mean(x * x, axis=0, keepdims=True) - mean ** 2   # no eps (torch dim==2)
    return (x - mean) / jnp.sqrt(var)


if __name__ == "__main__":
    key = jax.random.PRNGKey(0)
    k1, k2 = jax.random.split(key)

    # ---- dim == 4 (NCHW) ----
    N, C, H, W = 2, 4, 16, 16
    x = jax.random.normal(k1, (N, C, H, W), dtype=jnp.float32) * 2.0 + 0.5
    y_ref, mm_ref, mv_ref = _ref_nchw_train(
        x, jnp.zeros((C,), jnp.float32), jnp.ones((C,), jnp.float32))

    # 1) training, fused fast path
    bn = BatchNormPallas(C, dim=4)
    y = jax.block_until_ready(bn(x, training=True))
    np.testing.assert_allclose(np.asarray(y), np.asarray(y_ref), rtol=1e-4, atol=1e-5)
    np.testing.assert_allclose(np.asarray(bn.moving_mean), np.asarray(mm_ref),
                               rtol=1e-5, atol=1e-6)
    np.testing.assert_allclose(np.asarray(bn.moving_var), np.asarray(mv_ref),
                               rtol=1e-5, atol=1e-6)

    # 2) training, forced tiled two-pass path (stats kernel + scale/bias kernel)
    bn_t = BatchNormPallas(C, dim=4)
    bn_t.force_tiled = True
    y_t = jax.block_until_ready(bn_t(x, training=True))
    np.testing.assert_allclose(np.asarray(y_t), np.asarray(y_ref), rtol=1e-4, atol=1e-5)
    np.testing.assert_allclose(np.asarray(bn_t.moving_mean), np.asarray(mm_ref),
                               rtol=1e-5, atol=1e-6)
    np.testing.assert_allclose(np.asarray(bn_t.moving_var), np.asarray(mv_ref),
                               rtol=1e-5, atol=1e-6)

    # 3) eval (no_grad) path using the updated moving statistics
    mm_cur = jnp.asarray(bn.moving_mean).reshape(1, C, 1, 1)
    mv_cur = jnp.asarray(bn.moving_var).reshape(1, C, 1, 1)
    y_eval_ref = (x - mm_cur) / jnp.sqrt(mv_cur + EPSILON)
    y_eval = jax.block_until_ready(bn(x, training=False))
    np.testing.assert_allclose(np.asarray(y_eval), np.asarray(y_eval_ref),
                               rtol=1e-4, atol=1e-5)

    # ---- dim == 2 ----
    N2, C2 = 8, 32
    x2 = jax.random.normal(k2, (N2, C2), dtype=jnp.float32) * 1.5 - 0.25
    bn2d = BatchNormPallas(C2, dim=2)
    y2d = jax.block_until_ready(bn2d(x2, training=True))
    np.testing.assert_allclose(np.asarray(y2d), np.asarray(_ref_2d_train(x2)),
                               rtol=1e-4, atol=1e-5)
    mm2 = jnp.asarray(bn2d.moving_mean).reshape(1, C2)
    mv2 = jnp.asarray(bn2d.moving_var).reshape(1, C2)
    y2d_eval_ref = (x2 - mm2) / jnp.sqrt(mv2 + EPSILON)
    y2d_eval = jax.block_until_ready(bn2d(x2, training=False))
    np.testing.assert_allclose(np.asarray(y2d_eval), np.asarray(y2d_eval_ref),
                               rtol=1e-4, atol=1e-5)

    print("KERNEL_OK")
</pallas_src>

<mosaic_0001>
module attributes {stable_mosaic.version = 11 : i64} {
  func.func @_bn_train_fused_kernel(%arg0: memref<2x4x256xf32, #tpu.memory_space<vmem>>, %arg1: memref<4x1xf32, #tpu.memory_space<vmem>>, %arg2: memref<4x1xf32, #tpu.memory_space<vmem>>, %arg3: memref<4x1xf32, #tpu.memory_space<vmem>>, %arg4: memref<4x1xf32, #tpu.memory_space<vmem>>, %arg5: memref<2x4x256xf32, #tpu.memory_space<vmem>>, %arg6: memref<4x1xf32, #tpu.memory_space<vmem>>, %arg7: memref<4x1xf32, #tpu.memory_space<vmem>>) attributes {dimension_semantics = [], scalar_prefetch = 0 : i64, scratch_operands = 0 : i64, tpu.core_type = #tpu.core_type<tc>} {
    %c0 = arith.constant 0 : index
    %c0_0 = arith.constant 0 : index
    %c0_1 = arith.constant 0 : index
    %0 = vector.load %arg0[%c0, %c0_0, %c0_1] : memref<2x4x256xf32, #tpu.memory_space<vmem>>, vector<2x4x256xf32>
    %cst = arith.constant dense<0.000000e+00> : vector<4xf32>
    %1 = vector.multi_reduction <add>, %0, %cst [0, 2] : vector<2x4x256xf32> to vector<4xf32>
    %2 = vector.shape_cast %1 : vector<4xf32> to vector<1x4x1xf32>
    %cst_2 = arith.constant 5.120000e+02 : f32
    %3 = vector.broadcast %cst_2 : f32 to vector<1x4x1xf32>
    %4 = arith.divf %2, %3 : vector<1x4x1xf32>
    %5 = vector.shape_cast %4 : vector<1x4x1xf32> to vector<4x1xf32>
    %6 = arith.mulf %0, %0 : vector<2x4x256xf32>
    %cst_3 = arith.constant dense<0.000000e+00> : vector<4xf32>
    %7 = vector.multi_reduction <add>, %6, %cst_3 [0, 2] : vector<2x4x256xf32> to vector<4xf32>
    %8 = vector.shape_cast %7 : vector<4xf32> to vector<1x4x1xf32>
    %cst_4 = arith.constant 5.120000e+02 : f32
    %9 = vector.broadcast %cst_4 : f32 to vector<1x4x1xf32>
    %10 = arith.divf %8, %9 : vector<1x4x1xf32>
    %11 = vector.shape_cast %10 : vector<1x4x1xf32> to vector<4x1xf32>
    %12 = arith.mulf %5, %5 : vector<4x1xf32>
    %13 = arith.subf %11, %12 : vector<4x1xf32>
    %cst_5 = arith.constant 9.99999974E-6 : f32
    %14 = vector.broadcast %cst_5 : f32 to vector<4x1xf32>
    %15 = arith.addf %13, %14 : vector<4x1xf32>
    %c0_6 = arith.constant 0 : index
    %c0_7 = arith.constant 0 : index
    %16 = vector.load %arg1[%c0_6, %c0_7] : memref<4x1xf32, #tpu.memory_space<vmem>>, vector<4x1xf32>
    %17 = math.rsqrt %15 : vector<4x1xf32>
    %18 = arith.mulf %16, %17 : vector<4x1xf32>
    %c0_8 = arith.constant 0 : index
    %c0_9 = arith.constant 0 : index
    %19 = vector.load %arg2[%c0_8, %c0_9] : memref<4x1xf32, #tpu.memory_space<vmem>>, vector<4x1xf32>
    %20 = arith.mulf %5, %18 : vector<4x1xf32>
    %21 = arith.subf %19, %20 : vector<4x1xf32>
    %22 = vector.shape_cast %18 : vector<4x1xf32> to vector<1x4x1xf32>
    %23 = vector.broadcast %22 : vector<1x4x1xf32> to vector<2x4x256xf32>
    %24 = arith.mulf %0, %23 : vector<2x4x256xf32>
    %25 = vector.shape_cast %21 : vector<4x1xf32> to vector<1x4x1xf32>
    %26 = vector.broadcast %25 : vector<1x4x1xf32> to vector<2x4x256xf32>
    %27 = arith.addf %24, %26 : vector<2x4x256xf32>
    %c0_10 = arith.constant 0 : index
    %c0_11 = arith.constant 0 : index
    %c0_12 = arith.constant 0 : index
    %28 = vector.load %arg5[%c0_10, %c0_11, %c0_12] : memref<2x4x256xf32, #tpu.memory_space<vmem>>, vector<2x4x256xf32>
    tpu.vector_store %arg5[%c0_10, %c0_11, %c0_12], %27 {strides = array<i32>} : memref<2x4x256xf32, #tpu.memory_space<vmem>>, vector<2x4x256xf32>,
    %c0_13 = arith.constant 0 : index
    %c0_14 = arith.constant 0 : index
    %29 = vector.load %arg3[%c0_13, %c0_14] : memref<4x1xf32, #tpu.memory_space<vmem>>, vector<4x1xf32>
    %cst_15 = arith.constant 0.899999976 : f32
    %30 = vector.broadcast %cst_15 : f32 to vector<4x1xf32>
    %31 = arith.mulf %29, %30 : vector<4x1xf32>
    %cst_16 = arith.constant 1.000000e-01 : f32
    %32 = vector.broadcast %cst_16 : f32 to vector<4x1xf32>
    %33 = arith.mulf %32, %5 : vector<4x1xf32>
    %34 = arith.addf %31, %33 : vector<4x1xf32>
    %c0_17 = arith.constant 0 : index
    %c0_18 = arith.constant 0 : index
    %35 = vector.load %arg6[%c0_17, %c0_18] : memref<4x1xf32, #tpu.memory_space<vmem>>, vector<4x1xf32>
    tpu.vector_store %arg6[%c0_17, %c0_18], %34 {strides = array<i32>} : memref<4x1xf32, #tpu.memory_space<vmem>>, vector<4x1xf32>,
    %c0_19 = arith.constant 0 : index
    %c0_20 = arith.constant 0 : index
    %36 = vector.load %arg4[%c0_19, %c0_20] : memref<4x1xf32, #tpu.memory_space<vmem>>, vector<4x1xf32>
    %cst_21 = arith.constant 0.899999976 : f32
    %37 = vector.broadcast %cst_21 : f32 to vector<4x1xf32>
    %38 = arith.mulf %36, %37 : vector<4x1xf32>
    %cst_22 = arith.constant 1.000000e-01 : f32
    %39 = vector.broadcast %cst_22 : f32 to vector<4x1xf32>
    %40 = arith.mulf %39, %15 : vector<4x1xf32>
    %41 = arith.addf %38, %40 : vector<4x1xf32>
    %c0_23 = arith.constant 0 : index
    %c0_24 = arith.constant 0 : index
    %42 = vector.load %arg7[%c0_23, %c0_24] : memref<4x1xf32, #tpu.memory_space<vmem>>, vector<4x1xf32>
    tpu.vector_store %arg7[%c0_23, %c0_24], %41 {strides = array<i32>} : memref<4x1xf32, #tpu.memory_space<vmem>>, vector<4x1xf32>,
    return
  }
}

</mosaic_0001>

<llo_original>
// kernel: tpu_custom_call.1
$region0: #{tpu_custom_call.1}
  #allocation0 [shape = 'u32[]', space=smem, size = 0x4, offset = 0x4, fixed_abs, tag = 'smem constant byte address 0x4 - core index']
  #allocation1 [shape = 'u32[72,128]{1,0:T(1,128)}', space=vmem, size = 0x9000, scoped, tag = 'internal scratch']
  %s0 = inlined_call_operand.vmem [shape: f32[2,4,256], index: 0, kind: input, shape index: {}]
  %s1 = inlined_call_operand.vmem [shape: f32[4,1], index: 1, kind: input, shape index: {}]
  %s2 = inlined_call_operand.vmem [shape: f32[4,1], index: 2, kind: input, shape index: {}]
  %s3 = inlined_call_operand.vmem [shape: f32[4,1], index: 3, kind: input, shape index: {}]
  %s4 = inlined_call_operand.vmem [shape: f32[4,1], index: 4, kind: input, shape index: {}]
  %s5 = inlined_call_operand.hbm [shape: f32[2,4,256], index: 5, kind: output, shape index: {0}]
  %s6 = inlined_call_operand.vmem [shape: f32[4,1], index: 6, kind: output, shape index: {1}]
  %s7 = inlined_call_operand.vmem [shape: f32[4,1], index: 7, kind: output, shape index: {2}]
  %8 = xla_tuple %s5, %s6, %s7
  %s9 = sld [smem:[#allocation0]]
  $region46: #{tpu_custom_call.1} parent=0
    _
  %s11 = ssub.s32 1, %s9
  %s12 = scalar_select 0, %s11, %s9
  $region1: #{tpu_custom_call.1} parent=0
    #allocation2 [shape = 'u8[8192]{0}', space=vmem, size = 0x2000, scoped, tag = 'output window, operand 0, single buffered']
    #allocation3 [shape = 's32[1]{0}', space=sflag, size = 0x4, scoped, tag = 'scoped memory for tpu_custom_call.1']
    %13 = vsyncpa [#allocation3], 0
    // Predicated region
    $region2: #{tpu_custom_call.1} parent=1 // pred_check
      _
    $region3: #{tpu_custom_call.1} parent=1 // pred_check_branch
      %15 = sbr.rel (0) target = $region5
    $region4: #{tpu_custom_call.1} parent=1 // pred_region
      _
    $region5: #{tpu_custom_call.1} parent=1 // pred_fallthru
      _
    // Predicated region
    $region6: #{tpu_custom_call.1} parent=1 // pred_check
      _
    $region7: #{tpu_custom_call.1} parent=1 // pred_check_branch
      %17 = sbr.rel (0) target = $region9
    $region8: #{tpu_custom_call.1} parent=1 // pred_region
      _
    $region9: #{tpu_custom_call.1} parent=1 // pred_fallthru
      _
    // Predicated region
    $region10: #{tpu_custom_call.1} parent=1 // pred_check
      _
    $region11: #{tpu_custom_call.1} parent=1 // pred_check_branch
      %19 = sbr.rel (0) target = $region13
    $region12: #{tpu_custom_call.1} parent=1 // pred_region
      _
    $region13: #{tpu_custom_call.1} parent=1 // pred_fallthru
      _
    // Predicated region
    $region14: #{tpu_custom_call.1} parent=1 // pred_check
      _
    $region15: #{tpu_custom_call.1} parent=1 // pred_check_branch
      %21 = sbr.rel (0) target = $region17
    $region16: #{tpu_custom_call.1} parent=1 // pred_region
      _
    $region17: #{tpu_custom_call.1} parent=1 // pred_fallthru
      _
    // Predicated region
    $region18: #{tpu_custom_call.1} parent=1 // pred_check
      _
    $region19: #{tpu_custom_call.1} parent=1 // pred_check_branch
      %23 = sbr.rel (0) target = $region21
    $region20: #{tpu_custom_call.1} parent=1 // pred_region
      _
    $region21: #{tpu_custom_call.1} parent=1 // pred_fallthru
      _
    %v24 = vld [vmem:[%s0] sm:$0xff]
    %v25 = vld [vmem:[%s0 + $0x8] sm:$0xff]
    %28 = vst [vmem:[#allocation1] ss:$2 sm:$0xff] %v24
    %v29 = vld.sshfl [vmem:[#allocation1] sm:$0xff pattern:$0x75316420]
    %v30 = vld.sshfl [vmem:[#allocation1 + $0x8] sm:$0xff pattern:$0x75316420]
    %s31 = scalar_lea.vmem [#allocation1], 16
    %32 = vst [vmem:[%s31] ss:$2 sm:$0xff] %v25
    %v33 = vld.sshfl [vmem:[#allocation1 + $0x10] sm:$0xff pattern:$0x75316420]
    %v34 = vld.sshfl [vmem:[#allocation1 + $0x18] sm:$0xff pattern:$0x75316420]
    %vm39 = vcmask 1043456
    %v40 = vsel %vm39, %v29, 0.0
    %v41 = vsel %vm39, %v30, 0.0
    %v42 = vadd.f32 %v40, %v41
    %v43 = vsel %vm39, %v33, 0.0
    %v44 = vadd.f32 %v42, %v43
    %v45 = vsel %vm39, %v34, 0.0
    %v46 = vadd.f32 %v44, %v45
    %47 = vadd.xlane.f32.xlu0 %v46
    %v48 = vpop.xlane.xlu0 %47
    %v49 = vrcp.pop 512.0
    %v50 = vmul.f32 512.0, %v49
    %v51 = vsub.f32 1.0, %v50
    %v52 = vmul.f32 %v49, %v51
    %v53 = vadd.f32 %v49, %v52
    %vm54 = vweird.f32 %v49
    %v55 = vsel %vm54, %v49, %v53
    %v56 = vmul.f32 %v48, %v55
    %v57 = vmul.f32 %v24, %v24
    %v58 = vmul.f32 %v25, %v25
    %61 = vst [vmem:[#allocation1] ss:$2 sm:$0xff] %v57
    %v62 = vld.sshfl [vmem:[#allocation1] sm:$0xff pattern:$0x75316420]
    %v63 = vld.sshfl [vmem:[#allocation1 + $0x8] sm:$0xff pattern:$0x75316420]
    %s64 = scalar_lea.vmem [#allocation1], 16
    %65 = vst [vmem:[%s64] ss:$2 sm:$0xff] %v58
    %v66 = vld.sshfl [vmem:[#allocation1 + $0x10] sm:$0xff pattern:$0x75316420]
    %v67 = vld.sshfl [vmem:[#allocation1 + $0x18] sm:$0xff pattern:$0x75316420]
    %v72 = vsel %vm39, %v62, 0.0
    %v73 = vsel %vm39, %v63, 0.0
    %v74 = vadd.f32 %v72, %v73
    %v75 = vsel %vm39, %v66, 0.0
    %v76 = vadd.f32 %v74, %v75
    %v77 = vsel %vm39, %v67, 0.0
    %v78 = vadd.f32 %v76, %v77
    %79 = vadd.xlane.f32.xlu0 %v78
    %v80 = vpop.xlane.xlu0 %79
    %v81 = vmul.f32 %v80, %v55
    %v82 = vmul.f32 %v56, %v56
    %v83 = vsub.f32 %v81, %v82
    %v84 = vadd.f32 %v83, 1e-05
    %v85 = vld [vmem:[%s1] sm:$0xf]
    %v86 = vrsqrt.pop %v84
    %v87 = vmul.f32 %v86, %v84
    %v88 = vmul.f32 %v87, %v86
    %v89 = vmul.f32 0.5, %v88
    %v90 = vsub.f32 1.5, %v89
    %v91 = vmul.f32 %v86, %v90
    %vm92 = vweird.f32 %v84
    %vm93 = vweird.f32 %v86
    %vm94 = vmor %vm92, %vm93
    %v95 = vsel %vm94, %v86, %v91
    %v96 = vmul.f32 %v85, %v95
    %v97 = vld [vmem:[%s2] sm:$0xf]
    %v98 = vmul.f32 %v56, %v96
    %v99 = vsub.f32 %v97, %v98
    %101 = vset.pattern.permute.xlu0 0
    %102 = vperm.xlu0 %101, %v96
    %v103 = vpop.permute.xlu0 %102
    %v105 = vunpack.c.l.s4 839922192
    %v106 = vunpack.c.0.s8 %v105
    %v107 = vperm.slane %v103, %v106
    %v109 = vmul.f32 %v24, %v107
    %v110 = vmul.f32 %v25, %v107
    %112 = vset.pattern.permute.xlu0 0
    %113 = vperm.xlu0 %112, %v99
    %v114 = vpop.permute.xlu0 %113
    %v116 = vunpack.c.l.s4 839922192
    %v117 = vunpack.c.0.s8 %v116
    %v118 = vperm.slane %v114, %v117
    %v120 = vadd.f32 %v109, %v118
    %v121 = vadd.f32 %v110, %v118
    %122 = vst [vmem:[#allocation2] sm:$0xff] %v120
    %123 = vst [vmem:[#allocation2 + $0x8] sm:$0xff] %v121
    %v124 = vld [vmem:[%s3] sm:$0xf]
    %v125 = vmul.f32 %v124, 0.9
    %v126 = vmul.f32 %v56, 0.1
    %v127 = vadd.f32 %v125, %v126
    %vm128 = vcmask 3072
    %129 = vst.msk [vmem:[%s6] sm:$0xf] %vm128, %v127
    %v130 = vld [vmem:[%s4] sm:$0xf]
    %v131 = vmul.f32 %v130, 0.9
    %v132 = vmul.f32 %v84, 0.1
    %v133 = vadd.f32 %v131, %v132
    %134 = vst.msk [vmem:[%s7] sm:$0xf] %vm128, %v133
    // Predicated region
    $region22: #{tpu_custom_call.1} parent=1 // pred_check
      _
    $region23: #{tpu_custom_call.1} parent=1 // pred_check_branch
      %136 = sbr.rel (0) target = $region25
    $region24: #{tpu_custom_call.1} parent=1 // pred_region
      %138 = vsyncadd [#allocation3], 0
      %s139 = sshll.u32 [#allocation2], 4
      %s140 = int_to_ptr.vmem [resolvable:$true] %s139
      %s141 = sshll.u32 %s5, 4
      %s142 = int_to_ptr.hbm [resolvable:$true] %s141
      %147 = dma.vmem_to_hbm [thread:$0]  %s140, 256, %s142, [#allocation3], 128, 128, 8
    $region25: #{tpu_custom_call.1} parent=1 // pred_fallthru
      _
    // Predicated region
    $region26: #{tpu_custom_call.1} parent=1 // pred_check
      _
    $region27: #{tpu_custom_call.1} parent=1 // pred_check_branch
      %149 = sbr.rel (0) target = $region29
    $region28: #{tpu_custom_call.1} parent=1 // pred_region
      _
    $region29: #{tpu_custom_call.1} parent=1 // pred_fallthru
      _
    // Predicated region
    $region30: #{tpu_custom_call.1} parent=1 // pred_check
      _
    $region31: #{tpu_custom_call.1} parent=1 // pred_check_branch
      %151 = sbr.rel (0) target = $region33
    $region32: #{tpu_custom_call.1} parent=1 // pred_region
      _
    $region33: #{tpu_custom_call.1} parent=1 // pred_fallthru
      _
    // Predicated region
    $region34: #{tpu_custom_call.1} parent=1 // pred_check
      _
    $region35: #{tpu_custom_call.1} parent=1 // pred_check_branch
      %153 = sbr.rel (0) target = $region37
    $region36: #{tpu_custom_call.1} parent=1 // pred_region
      %155 = dma.done [#allocation3], 256
    $region37: #{tpu_custom_call.1} parent=1 // pred_fallthru
      _
    // Predicated region
    $region38: #{tpu_custom_call.1} parent=1 // pred_check
      _
    $region39: #{tpu_custom_call.1} parent=1 // pred_check_branch
      %157 = sbr.rel (0) target = $region41
    $region40: #{tpu_custom_call.1} parent=1 // pred_region
      _
    $region41: #{tpu_custom_call.1} parent=1 // pred_fallthru
      _
    // Predicated region
    $region42: #{tpu_custom_call.1} parent=1 // pred_check
      _
    $region43: #{tpu_custom_call.1} parent=1 // pred_check_branch
      %159 = sbr.rel (0) target = $region45
    $region44: #{tpu_custom_call.1} parent=1 // pred_region
      _
    $region45: #{tpu_custom_call.1} parent=1 // pred_fallthru
      _
    %160 = vsyncpa [#allocation3], 1

</llo_original>
